<compile_context>
chip_gen: v7x
topology: tpu7x:2x2x1
jax: 0.10.0
libtpu: 0.0.40
codegen_flags: <defaults>
</compile_context>

<pallas_src>
import functools
import math

import jax
import jax.numpy as jnp
from jax.experimental import pallas as pl
from jax.experimental.pallas import tpu as pltpu


def _round_up(x, m):
    return ((x + m - 1) // m) * m


def _pick_tile(total, cap):
    """Largest multiple of 128 that divides `total` and is <= cap (>= 128)."""
    best = 128
    t = 256
    while t <= min(total, cap):
        if total % t == 0:
            best = t
        t += 128
    return best


def _nn_assign_kernel(xn_row_ref, xn_col_ref, xsq_ref, assign_ref,
                      min_ref, arg_ref, *, tn):
    """One (row-block i, column-block j) step of the nearest-neighbour search.

    score[r, c] = 0.5*||xn_c||^2 - <xn_r, xn_c>
                = 0.5*(dist[r, c] - ||xn_r||^2)     -> same argmin over c as the
    PyTorch distance matrix.  Padded columns carry +5e29 baked into xsq, so
    they are never selected as nearest neighbours.
    """
    f32 = jnp.float32
    j = pl.program_id(1)

    @pl.when(j == 0)
    def _init():
        min_ref[...] = jnp.full_like(min_ref, jnp.inf)
        arg_ref[...] = jnp.zeros_like(arg_ref)

    # MXU contraction (tm, d) x (tn, d) -> (tm, tn); one VPU broadcast-subtract.
    score = xsq_ref[...] - jax.lax.dot_general(
        xn_row_ref[...], xn_col_ref[...],
        dimension_numbers=(((1,), (1,)), ((), ())),
        preferred_element_type=f32)                                  # (tm, tn)

    # Block-local argmin with first-minimum tie break (matches torch/jnp).
    col = jax.lax.broadcasted_iota(jnp.int32, score.shape, 1)        # (tm, tn)
    blk_min = jnp.min(score, axis=1, keepdims=True)                  # (tm, 1)
    blk_arg = jnp.min(jnp.where(score == blk_min, col, jnp.int32(tn)),
                      axis=1, keepdims=True) + j * tn                # (tm, 1)

    # Merge into the running (min, argmin); strict '<' keeps the earliest
    # column on ties, i.e. global first-minimum tie break.
    better = blk_min < min_ref[...]
    arg_ref[...] = jnp.where(better, blk_arg, arg_ref[...])
    min_ref[...] = jnp.where(better, blk_min, min_ref[...])

    @pl.when(j == pl.num_programs(1) - 1)
    def _write():
        assign_ref[...] = arg_ref[...]


def cocl_loss(features, temperature=0.5, alpha=1.0, labels=None, *,
              block_rows=256, block_cols=512, use_bf16_matmul=False):
    """Pallas implementation of ContrastiveClusteringLoss.forward (labels=None).

    Returns (total_loss, {'l_sm', 'l_dm', 'l_cl', 'ce'}).
    `use_bf16_matmul` casts the streamed feature tiles to bf16 (halves DMA/VMEM,
    ~3-6x MXU throughput for large D); it may flip near-tie argmins vs. f32.
    """
    if labels is not None:
        # TODO(synk): supervised branch of the reference returns Ellipsis; not implemented.
        raise NotImplementedError("labels-supervised branch not implemented")

    # `temperature` only enters through the softmax branch, whose row-mean
    # p_i == 1/B is data independent, so it cancels out of the loss.
    del temperature

    features = jnp.asarray(features, jnp.float32)
    b, d = features.shape

    # Data-independent components: l_sm = log(B), l_dm = -log(1 - 1/B).
    l_sm = math.log(b)
    l_dm = (math.log(b) - math.log(b - 1)) if b > 1 else float("inf")

    # ---- normalisation + squared norms hoisted out of the kernel ------------
    nrm = jnp.sqrt(jnp.sum(features * features, axis=1, keepdims=True))
    xn = features / jnp.maximum(nrm, 1e-12)              # F.normalize(dim=1) eps
    xsq_half = 0.5 * jnp.sum(xn * xn, axis=1)             # 0.5*||xn_j||^2, (B,)

    # ---- tiling --------------------------------------------------------------
    block_rows = max(128, _round_up(int(block_rows), 128))
    block_cols = max(128, _round_up(int(block_cols), 128))
    gran = 128 if b <= 1024 else (256 if b <= 4096 else 512)
    b_pad = _round_up(b, gran)
    d_pad = _round_up(d, 128)        # zero padding is exact for norms / dots
    tm = _pick_tile(b_pad, block_rows)
    tn = _pick_tile(b_pad, block_cols)

    compute_dtype = jnp.bfloat16 if use_bf16_matmul else jnp.float32
    itemsize = 2 if use_bf16_matmul else 4

    # Honest lane-padded VMEM estimate: double-buffered operand tiles +
    # per-step (tm, tn) temporaries + small scratch/output buffers.
    def _vmem_estimate(tm_, tn_):
        lhs = 2 * tm_ * d_pad * itemsize          # query row tile
        rhs = 2 * tn_ * d_pad * itemsize          # neighbour column tile
        xsq = 2 * 8 * tn_ * 4                     # (1, tn) lane row
        out = 2 * tm_ * 128 * 4                   # (tm, 1) i32 output block
        scr = 2 * tm_ * 128 * 4                   # (tm, 1) min/arg scratch
        tmp = 5 * tm_ * tn_ * 4                   # score/iota/compare temps
        return lhs + rhs + xsq + out + scr + tmp

    try:
        vmem_cap = int(pltpu.get_tpu_info().vmem_capacity_bytes)
    except Exception:  # conservative: per-core VMEM of the smallest part (v7x)
        vmem_cap = 64 * 1024 * 1024
    budget = (3 * vmem_cap) // 4

    while _vmem_estimate(tm, tn) > budget:
        if tn > 128 and tn >= tm:
            tn = _pick_tile(b_pad, tn // 2)
        elif tm > 128:
            tm = _pick_tile(b_pad, tm // 2)
        else:
            # TODO(synk): tile the feature dim as well for extremely large D.
            break

    cp = dict(dimension_semantics=("parallel", "arbitrary"))
    est = _vmem_estimate(tm, tn)
    if est > 12 * 1024 * 1024:
        cp["vmem_limit_bytes"] = int(min(budget, max(2 * est, 32 * 1024 * 1024)))

    # ---- padded operands -----------------------------------------------------
    xn_p = xn.astype(compute_dtype)
    if b_pad != b or d_pad != d:
        xn_p = jnp.pad(xn_p, ((0, b_pad - b), (0, d_pad - d)))
    # Padded-column mask folded into xsq: padded cols can never win the argmin.
    xsq_row = jnp.full((1, b_pad), 5e29, jnp.float32).at[0, :b].set(xsq_half)

    grid = (b_pad // tm, b_pad // tn)

    assign_p = pl.pallas_call(
        functools.partial(_nn_assign_kernel, tn=tn),
        out_shape=jax.ShapeDtypeStruct((b_pad, 1), jnp.int32),
        grid=grid,
        in_specs=[
            pl.BlockSpec((tm, d_pad), lambda i, j: (i, 0)),   # query rows
            pl.BlockSpec((tn, d_pad), lambda i, j: (j, 0)),   # neighbour cols
            pl.BlockSpec((1, tn), lambda i, j: (0, j)),       # 0.5*||xn_j||^2
        ],
        out_specs=pl.BlockSpec((tm, 1), lambda i, j: (i, 0)),
        scratch_shapes=[
            pltpu.VMEM((tm, 1), jnp.float32),   # running min score
            pltpu.VMEM((tm, 1), jnp.int32),     # running argmin (global col)
        ],
        compiler_params=pltpu.CompilerParams(**cp),
    )(xn_p, xn_p, xsq_row)

    # ---- O(B) epilogue: cluster histogram + entropy (matches the reference,
    # since absent clusters contribute exactly 0 to the entropy sum) ----------
    assign = assign_p[:b, 0]
    counts = jnp.zeros((b,), jnp.float32).at[assign].add(1.0)
    probs = counts / jnp.float32(b)
    l_cl = -jnp.sum(probs * jnp.log(probs + 1e-10))

    total = jnp.float32(alpha) * (jnp.float32(l_sm) + jnp.float32(l_dm) + l_cl)
    comps = {"l_sm": jnp.float32(l_sm), "l_dm": jnp.float32(l_dm),
             "l_cl": l_cl, "ce": 0.0}
    return total, comps


def _reference(features, temperature=0.5, alpha=1.0):
    """Pure-JAX reference mirroring the PyTorch forward (labels=None)."""
    x = jnp.asarray(features, jnp.float32)
    b = x.shape[0]
    xn = x / jnp.maximum(jnp.linalg.norm(x, axis=1, keepdims=True), 1e-12)
    sim = (xn @ xn.T) / temperature
    exp_sim = jnp.exp(sim)
    prob = exp_sim / jnp.sum(exp_sim, axis=1, keepdims=True)
    p_i = jnp.mean(prob, axis=1)
    l_sm = -jnp.mean(jnp.log(p_i))
    l_dm = -jnp.mean(jnp.log(1.0 - p_i))
    x_sq = jnp.sum(xn * xn, axis=1, keepdims=True)
    dist = x_sq + x_sq.T - 2.0 * (xn @ xn.T)
    assign = jnp.argmin(dist, axis=1)
    counts = jnp.sum(assign[:, None] == jnp.arange(b)[None, :], axis=0)
    probs = counts.astype(jnp.float32) / b
    l_cl = -jnp.sum(probs * jnp.log(probs + 1e-10))
    return alpha * (l_sm + l_dm + l_cl)


if __name__ == "__main__":
    key0, key1, key2 = jax.random.split(jax.random.PRNGKey(0), 3)

    # Small shape consistent with the module: [batch_size, feature_dim].
    feats = jax.random.normal(key0, (8, 32), dtype=jnp.float32)
    total, comps = cocl_loss(feats, temperature=0.5, alpha=1.0)
    total = jax.block_until_ready(total)
    ref = jax.block_until_ready(_reference(feats, 0.5, 1.0))
    assert jnp.isfinite(total), "non-finite loss"
    assert jnp.allclose(total, ref, rtol=1e-4, atol=1e-4), (total, ref)

    # Multi-row-block path with batch / feature padding + masking.
    feats2 = jax.random.normal(key1, (300, 32), dtype=jnp.float32)
    t2, _ = cocl_loss(feats2)
    t2 = jax.block_until_ready(t2)
    r2 = jax.block_until_ready(_reference(feats2))
    assert jnp.isfinite(t2), "non-finite loss (row-tiled path)"
    assert jnp.allclose(t2, r2, rtol=1e-4, atol=1e-4), (t2, r2)

    # Multi-column-block path (running-argmin merge across neighbour tiles).
    feats3 = jax.random.normal(key2, (640, 48), dtype=jnp.float32)
    t3, _ = cocl_loss(feats3)
    t3 = jax.block_until_ready(t3)
    r3 = jax.block_until_ready(_reference(feats3))
    assert jnp.isfinite(t3), "non-finite loss (column-tiled path)"
    assert jnp.allclose(t3, r3, rtol=1e-4, atol=1e-4), (t3, r3)

    print("KERNEL_OK")
</pallas_src>

<mosaic_0001>
module attributes {stable_mosaic.version = 11 : i64} {
  func.func @_nn_assign_kernel(%arg0: i32, %arg1: i32, %arg2: memref<128x128xf32, #tpu.memory_space<vmem>>, %arg3: memref<128x128xf32, #tpu.memory_space<vmem>>, %arg4: memref<1x128xf32, #tpu.memory_space<vmem>>, %arg5: memref<128x1xi32, #tpu.memory_space<vmem>>, %arg6: memref<128x1xf32, #tpu.memory_space<vmem>>, %arg7: memref<128x1xi32, #tpu.memory_space<vmem>>) attributes {dimension_semantics = [#tpu.dimension_semantics<parallel>, #tpu.dimension_semantics<arbitrary>], iteration_bounds = array<i64: 1, 1>, scalar_prefetch = 0 : i64, scratch_operands = 2 : i64, tpu.core_type = #tpu.core_type<tc>, window_params = [{transform_indices = @transform_0, window_bounds = array<i64: 128, 128>}, {transform_indices = @transform_1, window_bounds = array<i64: 128, 128>}, {transform_indices = @transform_2, window_bounds = array<i64: 1, 128>}, {transform_indices = @transform_3, window_bounds = array<i64: 128, 1>}]} {
    %c0_i32 = arith.constant 0 : i32
    %0 = arith.cmpi eq, %arg1, %c0_i32 : i32
    %1 = arith.extui %0 : i1 to i32
    %c0_i32_0 = arith.constant 0 : i32
    %2 = arith.cmpi ne, %1, %c0_i32_0 : i32
    scf.if %2 {
      %cst_21 = arith.constant 0x7F800000 : f32
      %32 = vector.broadcast %cst_21 : f32 to vector<128x1xf32>
      %c0_22 = arith.constant 0 : index
      %c0_23 = arith.constant 0 : index
      %33 = vector.load %arg6[%c0_22, %c0_23] : memref<128x1xf32, #tpu.memory_space<vmem>>, vector<128x1xf32>
      tpu.vector_store %arg6[%c0_22, %c0_23], %32 {strides = array<i32>} : memref<128x1xf32, #tpu.memory_space<vmem>>, vector<128x1xf32>,
      %c0_i32_24 = arith.constant 0 : i32
      %34 = vector.broadcast %c0_i32_24 : i32 to vector<128x1xi32>
      %c0_25 = arith.constant 0 : index
      %c0_26 = arith.constant 0 : index
      %35 = vector.load %arg7[%c0_25, %c0_26] : memref<128x1xi32, #tpu.memory_space<vmem>>, vector<128x1xi32>
      tpu.vector_store %arg7[%c0_25, %c0_26], %34 {strides = array<i32>} : memref<128x1xi32, #tpu.memory_space<vmem>>, vector<128x1xi32>,
    } else {
    }
    %c0 = arith.constant 0 : index
    %c0_1 = arith.constant 0 : index
    %3 = vector.load %arg4[%c0, %c0_1] : memref<1x128xf32, #tpu.memory_space<vmem>>, vector<1x128xf32>
    %c0_2 = arith.constant 0 : index
    %c0_3 = arith.constant 0 : index
    %4 = vector.load %arg2[%c0_2, %c0_3] : memref<128x128xf32, #tpu.memory_space<vmem>>, vector<128x128xf32>
    %c0_4 = arith.constant 0 : index
    %c0_5 = arith.constant 0 : index
    %5 = vector.load %arg3[%c0_4, %c0_5] : memref<128x128xf32, #tpu.memory_space<vmem>>, vector<128x128xf32>
    %cst = arith.constant dense<0.000000e+00> : vector<128x128xf32>
    %6 = tpu.matmul %4, %5, %cst {dimension_numbers = #tpu.dot_dimension_numbers<[1], [1], [0], [0], [0, 0, 1, 0], [], []>} : vector<128x128xf32>, vector<128x128xf32>, vector<128x128xf32> -> vector<128x128xf32>
    %7 = vector.broadcast %3 : vector<1x128xf32> to vector<128x128xf32>
    %8 = arith.subf %7, %6 : vector<128x128xf32>
    %9 = tpu.iota {dimensions = array<i32: 1>} : vector<128x128xi32>
    %cst_6 = arith.constant dense<0x7F800000> : vector<128xf32>
    %10 = vector.multi_reduction <minimumf>, %8, %cst_6 [1] : vector<128x128xf32> to vector<128xf32>
    %11 = vector.shape_cast %10 : vector<128xf32> to vector<128x1xf32>
    %12 = vector.broadcast %11 : vector<128x1xf32> to vector<128x128xf32>
    %13 = arith.cmpf oeq, %8, %12 : vector<128x128xf32>
    %c128_i32 = arith.constant 128 : i32
    %14 = vector.broadcast %c128_i32 : i32 to vector<128x128xi32>
    %15 = arith.select %13, %9, %14 : vector<128x128xi1>, vector<128x128xi32>
    %cst_7 = arith.constant dense<2147483647> : vector<128xi32>
    %16 = vector.multi_reduction <minsi>, %15, %cst_7 [1] : vector<128x128xi32> to vector<128xi32>
    %17 = vector.shape_cast %16 : vector<128xi32> to vector<128x1xi32>
    %c128_i32_8 = arith.constant 128 : i32
    %18 = arith.muli %arg1, %c128_i32_8 : i32
    %19 = vector.broadcast %18 : i32 to vector<128x1xi32>
    %20 = arith.addi %17, %19 : vector<128x1xi32>
    %c0_9 = arith.constant 0 : index
    %c0_10 = arith.constant 0 : index
    %21 = vector.load %arg6[%c0_9, %c0_10] : memref<128x1xf32, #tpu.memory_space<vmem>>, vector<128x1xf32>
    %22 = arith.cmpf olt, %11, %21 : vector<128x1xf32>
    %c0_11 = arith.constant 0 : index
    %c0_12 = arith.constant 0 : index
    %23 = vector.load %arg7[%c0_11, %c0_12] : memref<128x1xi32, #tpu.memory_space<vmem>>, vector<128x1xi32>
    %24 = arith.select %22, %20, %23 : vector<128x1xi1>, vector<128x1xi32>
    %c0_13 = arith.constant 0 : index
    %c0_14 = arith.constant 0 : index
    %25 = vector.load %arg7[%c0_13, %c0_14] : memref<128x1xi32, #tpu.memory_space<vmem>>, vector<128x1xi32>
    tpu.vector_store %arg7[%c0_13, %c0_14], %24 {strides = array<i32>} : memref<128x1xi32, #tpu.memory_space<vmem>>, vector<128x1xi32>,
    %c0_15 = arith.constant 0 : index
    %c0_16 = arith.constant 0 : index
    %26 = vector.load %arg6[%c0_15, %c0_16] : memref<128x1xf32, #tpu.memory_space<vmem>>, vector<128x1xf32>
    %27 = arith.select %22, %11, %26 : vector<128x1xi1>, vector<128x1xf32>
    %c0_17 = arith.constant 0 : index
    %c0_18 = arith.constant 0 : index
    %28 = vector.load %arg6[%c0_17, %c0_18] : memref<128x1xf32, #tpu.memory_space<vmem>>, vector<128x1xf32>
    tpu.vector_store %arg6[%c0_17, %c0_18], %27 {strides = array<i32>} : memref<128x1xf32, #tpu.memory_space<vmem>>, vector<128x1xf32>,
    %c0_i32_19 = arith.constant 0 : i32
    %29 = arith.cmpi eq, %arg1, %c0_i32_19 : i32
    %30 = arith.extui %29 : i1 to i32
    %c0_i32_20 = arith.constant 0 : i32
    %31 = arith.cmpi ne, %30, %c0_i32_20 : i32
    scf.if %31 {
      %c0_21 = arith.constant 0 : index
      %c0_22 = arith.constant 0 : index
      %32 = vector.load %arg7[%c0_21, %c0_22] : memref<128x1xi32, #tpu.memory_space<vmem>>, vector<128x1xi32>
      %c0_23 = arith.constant 0 : index
      %c0_24 = arith.constant 0 : index
      %33 = vector.load %arg5[%c0_23, %c0_24] : memref<128x1xi32, #tpu.memory_space<vmem>>, vector<128x1xi32>
      tpu.vector_store %arg5[%c0_23, %c0_24], %32 {strides = array<i32>} : memref<128x1xi32, #tpu.memory_space<vmem>>, vector<128x1xi32>,
    } else {
    }
    return
  }
  func.func @transform_0(%arg0: i32, %arg1: i32) -> (i32, i32) {
    %c0_i32 = arith.constant 0 : i32
    %c0_i32_0 = arith.constant 0 : i32
    return %arg0, %c0_i32 : i32, i32
  }
  func.func @transform_1(%arg0: i32, %arg1: i32) -> (i32, i32) {
    %c0_i32 = arith.constant 0 : i32
    %c0_i32_0 = arith.constant 0 : i32
    return %arg1, %c0_i32 : i32, i32
  }
  func.func @transform_2(%arg0: i32, %arg1: i32) -> (i32, i32) {
    %c0_i32 = arith.constant 0 : i32
    %c0_i32_0 = arith.constant 0 : i32
    return %c0_i32, %arg1 : i32, i32
  }
  func.func @transform_3(%arg0: i32, %arg1: i32) -> (i32, i32) {
    %c0_i32 = arith.constant 0 : i32
    %c0_i32_0 = arith.constant 0 : i32
    return %arg0, %c0_i32 : i32, i32
  }
}

</mosaic_0001>

<llo_original>
// kernel: tpu_custom_call.1
$region0: #{tpu_custom_call.1}
  #allocation0 [shape = 'u32[]', space=smem, size = 0x4, offset = 0x4, fixed_abs, tag = 'smem constant byte address 0x4 - core index']
  #allocation1 [shape = 'u32[144,128]{1,0:T(1,128)}', space=vmem, size = 0x12000, scoped, tag = 'internal scratch']
  #allocation2 [shape = 'f32[128,1]{1,0:T(8,128)}', space=vmem, size = 0x10000, scoped, tag = 'scratch operand']
  #allocation3 [shape = 's32[128,1]{1,0:T(8,128)}', space=vmem, size = 0x10000, scoped, tag = 'scratch operand']
  %s0 = inlined_call_operand.hbm [shape: f32[128,128], index: 0, kind: input, shape index: {}]
  %s1 = inlined_call_operand.hbm [shape: f32[128,128], index: 1, kind: input, shape index: {}]
  %s2 = inlined_call_operand.vmem [shape: f32[1,128], index: 2, kind: input, shape index: {}]
  %s3 = inlined_call_operand.vmem [shape: s32[128,1], index: 3, kind: output, shape index: {}]
  %s4 = sld [smem:[#allocation0]]
  $region38: #{tpu_custom_call.1} parent=0
    _
  %s6 = ssub.s32 1, %s4
  %s7 = scalar_select 0, %s6, %s4
  $region1: #{tpu_custom_call.1} parent=0
    #allocation4 [shape = 'u8[65536]{0}', space=vmem, size = 0x10000, scoped, tag = 'input window, operand 0, single buffered']
    #allocation5 [shape = 's32[1]{0}', space=sflag, size = 0x4, scoped, tag = 'scoped memory for tpu_custom_call.1']
    #allocation6 [shape = 'u8[65536]{0}', space=vmem, size = 0x10000, scoped, tag = 'input window, operand 1, single buffered']
    #allocation7 [shape = 's32[1]{0}', space=sflag, size = 0x4, scoped, tag = 'scoped memory for tpu_custom_call.1']
    %8 = vsyncpa [#allocation5], 0
    %9 = vsyncpa [#allocation7], 0
    // Predicated region
    $region2: #{tpu_custom_call.1} parent=1 // pred_check
      _
    $region3: #{tpu_custom_call.1} parent=1 // pred_check_branch
      %11 = sbr.rel (0) target = $region5
    $region4: #{tpu_custom_call.1} parent=1 // pred_region
      %s13 = ssub.s32 2048, 2048
      %14 = vsyncadd [#allocation5], %s13
      %s15 = sshll.u32 [#allocation4], 4
      %s16 = int_to_ptr.vmem [resolvable:$true] %s15
      %21 = dma.hbm_to_vmem [thread:$0]  %s0, 2048, %s16, [#allocation5], 128, 128, 8
    $region5: #{tpu_custom_call.1} parent=1 // pred_fallthru
      _
    // Predicated region
    $region6: #{tpu_custom_call.1} parent=1 // pred_check
      _
    $region7: #{tpu_custom_call.1} parent=1 // pred_check_branch
      %23 = sbr.rel (0) target = $region9
    $region8: #{tpu_custom_call.1} parent=1 // pred_region
      %s25 = ssub.s32 2048, 2048
      %26 = vsyncadd [#allocation7], %s25
      %s27 = sshll.u32 [#allocation6], 4
      %s28 = int_to_ptr.vmem [resolvable:$true] %s27
      %33 = dma.hbm_to_vmem [thread:$0]  %s1, 2048, %s28, [#allocation7], 128, 128, 8
    $region9: #{tpu_custom_call.1} parent=1 // pred_fallthru
      _
    // Predicated region
    $region10: #{tpu_custom_call.1} parent=1 // pred_check
      _
    $region11: #{tpu_custom_call.1} parent=1 // pred_check_branch
      %35 = sbr.rel (0) target = $region13
    $region12: #{tpu_custom_call.1} parent=1 // pred_region
      _
    $region13: #{tpu_custom_call.1} parent=1 // pred_fallthru
      _
    // Predicated region
    $region14: #{tpu_custom_call.1} parent=1 // pred_check
      _
    $region15: #{tpu_custom_call.1} parent=1 // pred_check_branch
      %37 = sbr.rel (0) target = $region17
    $region16: #{tpu_custom_call.1} parent=1 // pred_region
      %38 = dma.done [#allocation5], 2048
    $region17: #{tpu_custom_call.1} parent=1 // pred_fallthru
      _
    // Predicated region
    $region18: #{tpu_custom_call.1} parent=1 // pred_check
      _
    $region19: #{tpu_custom_call.1} parent=1 // pred_check_branch
      %40 = sbr.rel (0) target = $region21
    $region20: #{tpu_custom_call.1} parent=1 // pred_region
      %41 = dma.done [#allocation7], 2048
    $region21: #{tpu_custom_call.1} parent=1 // pred_fallthru
      _
    %p42 = scmp.eq.s32.totalorder 0, 0
    // Predicated region
    $region22: #{tpu_custom_call.1} parent=1 // pred_check
      %p43 = pneg %p42
    $region23: #{tpu_custom_call.1} parent=1 // pred_check_branch
      %45 = sbr.rel (%p43) target = $region25
    $region24: #{tpu_custom_call.1} parent=1 // pred_region
      %vm46 = vcmask 7168
      %47 = vst.msk [vmem:[#allocation2] sm:$0xff] %vm46, inf
      %48 = vst.msk [vmem:[#allocation2 + $0x8] sm:$0xff] %vm46, inf
      %49 = vst.msk [vmem:[#allocation2 + $0x10] sm:$0xff] %vm46, inf
      %50 = vst.msk [vmem:[#allocation2 + $0x18] sm:$0xff] %vm46, inf
      %51 = vst.msk [vmem:[#allocation2 + $0x20] sm:$0xff] %vm46, inf
      %52 = vst.msk [vmem:[#allocation2 + $0x28] sm:$0xff] %vm46, inf
      %53 = vst.msk [vmem:[#allocation2 + $0x30] sm:$0xff] %vm46, inf
      %54 = vst.msk [vmem:[#allocation2 + $0x38] sm:$0xff] %vm46, inf
      %55 = vst.msk [vmem:[#allocation2 + $0x40] sm:$0xff] %vm46, inf
      %56 = vst.msk [vmem:[#allocation2 + $0x48] sm:$0xff] %vm46, inf
      %57 = vst.msk [vmem:[#allocation2 + $0x50] sm:$0xff] %vm46, inf
      %58 = vst.msk [vmem:[#allocation2 + $0x58] sm:$0xff] %vm46, inf
      %59 = vst.msk [vmem:[#allocation2 + $0x60] sm:$0xff] %vm46, inf
      %60 = vst.msk [vmem:[#allocation2 + $0x68] sm:$0xff] %vm46, inf
      %61 = vst.msk [vmem:[#allocation2 + $0x70] sm:$0xff] %vm46, inf
      %62 = vst.msk [vmem:[#allocation2 + $0x78] sm:$0xff] %vm46, inf
      %63 = vst.msk [vmem:[#allocation3] sm:$0xff] %vm46, 0
      %64 = vst.msk [vmem:[#allocation3 + $0x8] sm:$0xff] %vm46, 0
      %65 = vst.msk [vmem:[#allocation3 + $0x10] sm:$0xff] %vm46, 0
      %66 = vst.msk [vmem:[#allocation3 + $0x18] sm:$0xff] %vm46, 0
      %67 = vst.msk [vmem:[#allocation3 + $0x20] sm:$0xff] %vm46, 0
      %68 = vst.msk [vmem:[#allocation3 + $0x28] sm:$0xff] %vm46, 0
      %69 = vst.msk [vmem:[#allocation3 + $0x30] sm:$0xff] %vm46, 0
      %70 = vst.msk [vmem:[#allocation3 + $0x38] sm:$0xff] %vm46, 0
      %71 = vst.msk [vmem:[#allocation3 + $0x40] sm:$0xff] %vm46, 0
      %72 = vst.msk [vmem:[#allocation3 + $0x48] sm:$0xff] %vm46, 0
      %73 = vst.msk [vmem:[#allocation3 + $0x50] sm:$0xff] %vm46, 0
      %74 = vst.msk [vmem:[#allocation3 + $0x58] sm:$0xff] %vm46, 0
      %75 = vst.msk [vmem:[#allocation3 + $0x60] sm:$0xff] %vm46, 0
      %76 = vst.msk [vmem:[#allocation3 + $0x68] sm:$0xff] %vm46, 0
      %77 = vst.msk [vmem:[#allocation3 + $0x70] sm:$0xff] %vm46, 0
      %78 = vst.msk [vmem:[#allocation3 + $0x78] sm:$0xff] %vm46, 0
    $region25: #{tpu_custom_call.1} parent=1 // pred_fallthru
      _
    %v79 = vld [vmem:[%s2] sm:$0x1]
    %v80 = vld [vmem:[#allocation4] sm:$0xff]
    %v81 = vld [vmem:[#allocation4 + $0x8] sm:$0xff]
    %v82 = vld [vmem:[#allocation4 + $0x10] sm:$0xff]
    %v83 = vld [vmem:[#allocation4 + $0x18] sm:$0xff]
    %v84 = vld [vmem:[#allocation4 + $0x20] sm:$0xff]
    %v85 = vld [vmem:[#allocation4 + $0x28] sm:$0xff]
    %v86 = vld [vmem:[#allocation4 + $0x30] sm:$0xff]
    %v87 = vld [vmem:[#allocation4 + $0x38] sm:$0xff]
    %v88 = vld [vmem:[#allocation4 + $0x40] sm:$0xff]
    %v89 = vld [vmem:[#allocation4 + $0x48] sm:$0xff]
    %v90 = vld [vmem:[#allocation4 + $0x50] sm:$0xff]
    %v91 = vld [vmem:[#allocation4 + $0x58] sm:$0xff]
    %v92 = vld [vmem:[#allocation4 + $0x60] sm:$0xff]
    %v93 = vld [vmem:[#allocation4 + $0x68] sm:$0xff]
    %v94 = vld [vmem:[#allocation4 + $0x70] sm:$0xff]
    %v95 = vld [vmem:[#allocation4 + $0x78] sm:$0xff]
    %v96 = vld [vmem:[#allocation6] sm:$0xff]
    %v97 = vld [vmem:[#allocation6 + $0x8] sm:$0xff]
    %v98 = vld [vmem:[#allocation6 + $0x10] sm:$0xff]
    %v99 = vld [vmem:[#allocation6 + $0x18] sm:$0xff]
    %v100 = vld [vmem:[#allocation6 + $0x20] sm:$0xff]
    %v101 = vld [vmem:[#allocation6 + $0x28] sm:$0xff]
    %v102 = vld [vmem:[#allocation6 + $0x30] sm:$0xff]
    %v103 = vld [vmem:[#allocation6 + $0x38] sm:$0xff]
    %v104 = vld [vmem:[#allocation6 + $0x40] sm:$0xff]
    %v105 = vld [vmem:[#allocation6 + $0x48] sm:$0xff]
    %v106 = vld [vmem:[#allocation6 + $0x50] sm:$0xff]
    %v107 = vld [vmem:[#allocation6 + $0x58] sm:$0xff]
    %v108 = vld [vmem:[#allocation6 + $0x60] sm:$0xff]
    %v109 = vld [vmem:[#allocation6 + $0x68] sm:$0xff]
    %v110 = vld [vmem:[#allocation6 + $0x70] sm:$0xff]
    %v111 = vld [vmem:[#allocation6 + $0x78] sm:$0xff]
    %112 = vmatprep.subr.mxu0 0.0
    %113 = vmatpush1.xpose.msra.mxu0 %v96
    %114 = vmatprep.subr.mxu0 0.0
    %115 = vmatpush1.xpose.msra.mxu0 %v97
    %116 = vmatprep.subr.mxu0 0.0
    %117 = vmatpush1.xpose.msra.mxu0 %v98
    %118 = vmatprep.subr.mxu0 0.0
    %119 = vmatpush1.xpose.msra.mxu0 %v99
    %120 = vmatprep.subr.mxu0 0.0
    %121 = vmatpush1.xpose.msra.mxu0 %v100
    %122 = vmatprep.subr.mxu0 0.0
    %123 = vmatpush1.xpose.msra.mxu0 %v101
    %124 = vmatprep.subr.mxu0 0.0
    %125 = vmatpush1.xpose.msra.mxu0 %v102
    %126 = vmatprep.subr.mxu0 0.0
    %127 = vmatpush1.xpose.msra.mxu0 %v103
    %128 = vmatprep.subr.mxu0 0.0
    %129 = vmatpush1.xpose.msra.mxu0 %v104
    %130 = vmatprep.subr.mxu0 0.0
    %131 = vmatpush1.xpose.msra.mxu0 %v105
    %132 = vmatprep.subr.mxu0 0.0
    %133 = vmatpush1.xpose.msra.mxu0 %v106
    %134 = vmatprep.subr.mxu0 0.0
    %135 = vmatpush1.xpose.msra.mxu0 %v107
    %136 = vmatprep.subr.mxu0 0.0
    %137 = vmatpush1.xpose.msra.mxu0 %v108
    %138 = vmatprep.subr.mxu0 0.0
    %139 = vmatpush1.xpose.msra.mxu0 %v109
    %140 = vmatprep.subr.mxu0 0.0
    %141 = vmatpush1.xpose.msra.mxu0 %v110
    %142 = vmatprep.subr.mxu0 0.0
    %143 = vmatpush1.xpose.msra.mxu0 %v111
    %144 = vmatprep.subr.mxu0 0.0
    %145 = vmatpush1.xpose.msra.mxu0 0.0
    %146 = vmatprep.subr.mxu0 0.0
    %147 = vmatpush1.xpose.msra.mxu0 0.0
    %148 = vmatprep.subr.mxu0 0.0
    %149 = vmatpush1.xpose.msra.mxu0 0.0
    %150 = vmatprep.subr.mxu0 0.0
    %151 = vmatpush1.xpose.msra.mxu0 0.0
    %152 = vmatprep.subr.mxu0 0.0
    %153 = vmatpush1.xpose.msra.mxu0 0.0
    %154 = vmatprep.subr.mxu0 0.0
    %155 = vmatpush1.xpose.msra.mxu0 0.0
    %156 = vmatprep.subr.mxu0 0.0
    %157 = vmatpush1.xpose.msra.mxu0 0.0
    %158 = vmatprep.subr.mxu0 0.0
    %159 = vmatpush1.xpose.msra.mxu0 0.0
    %160 = vmatprep.subr.mxu0 0.0
    %161 = vmatpush1.xpose.msra.mxu0 0.0
    %162 = vmatprep.subr.mxu0 0.0
    %163 = vmatpush1.xpose.msra.mxu0 0.0
    %164 = vmatprep.subr.mxu0 0.0
    %165 = vmatpush1.xpose.msra.mxu0 0.0
    %166 = vmatprep.subr.mxu0 0.0
    %167 = vmatpush1.xpose.msra.mxu0 0.0
    %168 = vmatprep.subr.mxu0 0.0
    %169 = vmatpush1.xpose.msra.mxu0 0.0
    %170 = vmatprep.subr.mxu0 0.0
    %171 = vmatpush1.xpose.msra.mxu0 0.0
    %172 = vmatprep.subr.mxu0 0.0
    %173 = vmatpush1.xpose.msra.mxu0 0.0
    %174 = vmatprep.subr.mxu0 0.0
    %175 = vmatpush1.xpose.msra.mxu0 0.0
    %176 = vmatprep.mubr.f32.mxu0 0.0
    %177 = vmatmul.mubr.f32.gmra.mrb[0].mxu0 %v80
    %v178 = vpop.f32.mrb[0].mxu0
    %v179 = vadd.f32 0.0, %v178
    %v180 = vpop.f32.mrb[0].mxu0
    %181 = vmatprep.mubr.f32.mxu0 0.0
    %182 = vmatmul.mubr.f32.gmra.mrb[0].mxu0 %v81
    %v183 = vpop.f32.mrb[0].mxu0
    %v184 = vadd.f32 0.0, %v183
    %v185 = vpop.f32.mrb[0].mxu0
    %186 = vmatprep.mubr.f32.mxu0 0.0
    %187 = vmatmul.mubr.f32.gmra.mrb[0].mxu0 %v82
    %v188 = vpop.f32.mrb[0].mxu0
    %v189 = vadd.f32 0.0, %v188
    %v190 = vpop.f32.mrb[0].mxu0
    %191 = vmatprep.mubr.f32.mxu0 0.0
    %192 = vmatmul.mubr.f32.gmra.mrb[0].mxu0 %v83
    %v193 = vpop.f32.mrb[0].mxu0
    %v194 = vadd.f32 0.0, %v193
    %v195 = vpop.f32.mrb[0].mxu0
    %196 = vmatprep.mubr.f32.mxu0 0.0
    %197 = vmatmul.mubr.f32.gmra.mrb[0].mxu0 %v84
    %v198 = vpop.f32.mrb[0].mxu0
    %v199 = vadd.f32 0.0, %v198
    %v200 = vpop.f32.mrb[0].mxu0
    %201 = vmatprep.mubr.f32.mxu0 0.0
    %202 = vmatmul.mubr.f32.gmra.mrb[0].mxu0 %v85
    %v203 = vpop.f32.mrb[0].mxu0
    %v204 = vadd.f32 0.0, %v203
    %v205 = vpop.f32.mrb[0].mxu0
    %206 = vmatprep.mubr.f32.mxu0 0.0
    %207 = vmatmul.mubr.f32.gmra.mrb[0].mxu0 %v86
    %v208 = vpop.f32.mrb[0].mxu0
    %v209 = vadd.f32 0.0, %v208
    %v210 = vpop.f32.mrb[0].mxu0
    %211 = vmatprep.mubr.f32.mxu0 0.0
    %212 = vmatmul.mubr.f32.gmra.mrb[0].mxu0 %v87
    %v213 = vpop.f32.mrb[0].mxu0
    %v214 = vadd.f32 0.0, %v213
    %v215 = vpop.f32.mrb[0].mxu0
    %216 = vmatprep.mubr.f32.mxu0 0.0
    %217 = vmatmul.mubr.f32.gmra.mrb[0].mxu0 %v88
    %v218 = vpop.f32.mrb[0].mxu0
    %v219 = vadd.f32 0.0, %v218
    %v220 = vpop.f32.mrb[0].mxu0
    %221 = vmatprep.mubr.f32.mxu0 0.0
    %222 = vmatmul.mubr.f32.gmra.mrb[0].mxu0 %v89
    %v223 = vpop.f32.mrb[0].mxu0
    %v224 = vadd.f32 0.0, %v223
    %v225 = vpop.f32.mrb[0].mxu0
    %226 = vmatprep.mubr.f32.mxu0 0.0
    %227 = vmatmul.mubr.f32.gmra.mrb[0].mxu0 %v90
    %v228 = vpop.f32.mrb[0].mxu0
    %v229 = vadd.f32 0.0, %v228
    %v230 = vpop.f32.mrb[0].mxu0
    %231 = vmatprep.mubr.f32.mxu0 0.0
    %232 = vmatmul.mubr.f32.gmra.mrb[0].mxu0 %v91
    %v233 = vpop.f32.mrb[0].mxu0
    %v234 = vadd.f32 0.0, %v233
    %v235 = vpop.f32.mrb[0].mxu0
    %236 = vmatprep.mubr.f32.mxu0 0.0
    %237 = vmatmul.mubr.f32.gmra.mrb[0].mxu0 %v92
    %v238 = vpop.f32.mrb[0].mxu0
    %v239 = vadd.f32 0.0, %v238
    %v240 = vpop.f32.mrb[0].mxu0
    %241 = vmatprep.mubr.f32.mxu0 0.0
    %242 = vmatmul.mubr.f32.gmra.mrb[0].mxu0 %v93
    %v243 = vpop.f32.mrb[0].mxu0
    %v244 = vadd.f32 0.0, %v243
    %v245 = vpop.f32.mrb[0].mxu0
    %246 = vmatprep.mubr.f32.mxu0 0.0
    %247 = vmatmul.mubr.f32.gmra.mrb[0].mxu0 %v94
    %v248 = vpop.f32.mrb[0].mxu0
    %v249 = vadd.f32 0.0, %v248
    %v250 = vpop.f32.mrb[0].mxu0
    %251 = vmatprep.mubr.f32.mxu0 0.0
    %252 = vmatmul.mubr.f32.gmra.mrb[0].mxu0 %v95
    %v253 = vpop.f32.mrb[0].mxu0
    %v254 = vadd.f32 0.0, %v253
    %v255 = vpop.f32.mrb[0].mxu0
    %256 = vdwg.mxu0
    %v258 = vlaneseq
    %v259 = vshrl.u32 %v258, 7
    %v260 = vsub.s32 0, %v259
    %v261 = vrot.slane %v79, %v260
    %v263 = vsub.f32 %v261, %v179
    %v264 = vsub.f32 %v261, %v184
    %v265 = vsub.f32 %v261, %v189
    %v266 = vsub.f32 %v261, %v194
    %v267 = vsub.f32 %v261, %v199
    %v268 = vsub.f32 %v261, %v204
    %v269 = vsub.f32 %v261, %v209
    %v270 = vsub.f32 %v261, %v214
    %v271 = vsub.f32 %v261, %v219
    %v272 = vsub.f32 %v261, %v224
    %v273 = vsub.f32 %v261, %v229
    %v274 = vsub.f32 %v261, %v234
    %v275 = vsub.f32 %v261, %v239
    %v276 = vsub.f32 %v261, %v244
    %v277 = vsub.f32 %v261, %v249
    %v278 = vsub.f32 %v261, %v254
    %v279 = vlaneseq
    %v280 = vand.u32 %v279, 127
    %281 = vmin.xlane.f32.xlu0 %v263
    %v282 = vpop.xlane.xlu0 %281
    %283 = vmin.xlane.f32.xlu0 %v264
    %v284 = vpop.xlane.xlu0 %283
    %285 = vmin.xlane.f32.xlu0 %v265
    %v286 = vpop.xlane.xlu0 %285
    %287 = vmin.xlane.f32.xlu0 %v266
    %v288 = vpop.xlane.xlu0 %287
    %289 = vmin.xlane.f32.xlu0 %v267
    %v290 = vpop.xlane.xlu0 %289
    %291 = vmin.xlane.f32.xlu0 %v268
    %v292 = vpop.xlane.xlu0 %291
    %293 = vmin.xlane.f32.xlu0 %v269
    %v294 = vpop.xlane.xlu0 %293
    %295 = vmin.xlane.f32.xlu0 %v270
    %v296 = vpop.xlane.xlu0 %295
    %297 = vmin.xlane.f32.xlu0 %v271
    %v298 = vpop.xlane.xlu0 %297
    %299 = vmin.xlane.f32.xlu0 %v272
    %v300 = vpop.xlane.xlu0 %299
    %301 = vmin.xlane.f32.xlu0 %v273
    %v302 = vpop.xlane.xlu0 %301
    %303 = vmin.xlane.f32.xlu0 %v274
    %v304 = vpop.xlane.xlu0 %303
    %305 = vmin.xlane.f32.xlu0 %v275
    %v306 = vpop.xlane.xlu0 %305
    %307 = vmin.xlane.f32.xlu0 %v276
    %v308 = vpop.xlane.xlu0 %307
    %309 = vmin.xlane.f32.xlu0 %v277
    %v310 = vpop.xlane.xlu0 %309
    %311 = vmin.xlane.f32.xlu0 %v278
    %v312 = vpop.xlane.xlu0 %311
    %vm313 = vcmp.eq.f32.partialorder %v263, %v282
    %vm314 = vcmp.eq.f32.partialorder %v264, %v284
    %vm315 = vcmp.eq.f32.partialorder %v265, %v286
    %vm316 = vcmp.eq.f32.partialorder %v266, %v288
    %vm317 = vcmp.eq.f32.partialorder %v267, %v290
    %vm318 = vcmp.eq.f32.partialorder %v268, %v292
    %vm319 = vcmp.eq.f32.partialorder %v269, %v294
    %vm320 = vcmp.eq.f32.partialorder %v270, %v296
    %vm321 = vcmp.eq.f32.partialorder %v271, %v298
    %vm322 = vcmp.eq.f32.partialorder %v272, %v300
    %vm323 = vcmp.eq.f32.partialorder %v273, %v302
    %vm324 = vcmp.eq.f32.partialorder %v274, %v304
    %vm325 = vcmp.eq.f32.partialorder %v275, %v306
    %vm326 = vcmp.eq.f32.partialorder %v276, %v308
    %vm327 = vcmp.eq.f32.partialorder %v277, %v310
    %vm328 = vcmp.eq.f32.partialorder %v278, %v312
    %v329 = vsel %vm313, %v280, 128
    %v330 = vsel %vm314, %v280, 128
    %v331 = vsel %vm315, %v280, 128
    %v332 = vsel %vm316, %v280, 128
    %v333 = vsel %vm317, %v280, 128
    %v334 = vsel %vm318, %v280, 128
    %v335 = vsel %vm319, %v280, 128
    %v336 = vsel %vm320, %v280, 128
    %v337 = vsel %vm321, %v280, 128
    %v338 = vsel %vm322, %v280, 128
    %v339 = vsel %vm323, %v280, 128
    %v340 = vsel %vm324, %v280, 128
    %v341 = vsel %vm325, %v280, 128
    %v342 = vsel %vm326, %v280, 128
    %v343 = vsel %vm327, %v280, 128
    %v344 = vsel %vm328, %v280, 128
    %v345 = vand.u32 %v329, 65535
    %v346 = vshra.s32 %v329, 16
    %v347 = vcvt.s32.f32 %v345
    %v348 = vcvt.s32.f32 %v346
    %349 = vmin.xlane.f32.xlu0 %v348
    %v350 = vpop.xlane.xlu0 %349
    %vm351 = vcmp.eq.f32.partialorder %v348, %v350
    %v352 = vsel %vm351, %v347, inf
    %353 = vmin.xlane.f32.xlu0 %v352
    %v354 = vpop.xlane.xlu0 %353
    %v355 = vcvt.f32.s32 %v354
    %v356 = vcvt.f32.s32 %v350
    %v357 = vshll.u32 %v356, 16
    %v358 = vadd.s32 %v357, %v355
    %v359 = vand.u32 %v330, 65535
    %v360 = vshra.s32 %v330, 16
    %v361 = vcvt.s32.f32 %v359
    %v362 = vcvt.s32.f32 %v360
    %363 = vmin.xlane.f32.xlu0 %v362
    %v364 = vpop.xlane.xlu0 %363
    %vm365 = vcmp.eq.f32.partialorder %v362, %v364
    %v366 = vsel %vm365, %v361, inf
    %367 = vmin.xlane.f32.xlu0 %v366
    %v368 = vpop.xlane.xlu0 %367
    %v369 = vcvt.f32.s32 %v368
    %v370 = vcvt.f32.s32 %v364
    %v371 = vshll.u32 %v370, 16
    %v372 = vadd.s32 %v371, %v369
    %v373 = vand.u32 %v331, 65535
    %v374 = vshra.s32 %v331, 16
    %v375 = vcvt.s32.f32 %v373
    %v376 = vcvt.s32.f32 %v374
    %377 = vmin.xlane.f32.xlu0 %v376
    %v378 = vpop.xlane.xlu0 %377
    %vm379 = vcmp.eq.f32.partialorder %v376, %v378
    %v380 = vsel %vm379, %v375, inf
    %381 = vmin.xlane.f32.xlu0 %v380
    %v382 = vpop.xlane.xlu0 %381
    %v383 = vcvt.f32.s32 %v382
    %v384 = vcvt.f32.s32 %v378
    %v385 = vshll.u32 %v384, 16
    %v386 = vadd.s32 %v385, %v383
    %v387 = vand.u32 %v332, 65535
    %v388 = vshra.s32 %v332, 16
    %v389 = vcvt.s32.f32 %v387
    %v390 = vcvt.s32.f32 %v388
    %391 = vmin.xlane.f32.xlu0 %v390
    %v392 = vpop.xlane.xlu0 %391
    %vm393 = vcmp.eq.f32.partialorder %v390, %v392
    %v394 = vsel %vm393, %v389, inf
    %395 = vmin.xlane.f32.xlu0 %v394
    %v396 = vpop.xlane.xlu0 %395
    %v397 = vcvt.f32.s32 %v396
    %v398 = vcvt.f32.s32 %v392
    %v399 = vshll.u32 %v398, 16
    %v400 = vadd.s32 %v399, %v397
    %v401 = vand.u32 %v333, 65535
    %v402 = vshra.s32 %v333, 16
    %v403 = vcvt.s32.f32 %v401
    %v404 = vcvt.s32.f32 %v402
    %405 = vmin.xlane.f32.xlu0 %v404
    %v406 = vpop.xlane.xlu0 %405
    %vm407 = vcmp.eq.f32.partialorder %v404, %v406
    %v408 = vsel %vm407, %v403, inf
    %409 = vmin.xlane.f32.xlu0 %v408
    %v410 = vpop.xlane.xlu0 %409
    %v411 = vcvt.f32.s32 %v410
    %v412 = vcvt.f32.s32 %v406
    %v413 = vshll.u32 %v412, 16
    %v414 = vadd.s32 %v413, %v411
    %v415 = vand.u32 %v334, 65535
    %v416 = vshra.s32 %v334, 16
    %v417 = vcvt.s32.f32 %v415
    %v418 = vcvt.s32.f32 %v416
    %419 = vmin.xlane.f32.xlu0 %v418
    %v420 = vpop.xlane.xlu0 %419
    %vm421 = vcmp.eq.f32.partialorder %v418, %v420
    %v422 = vsel %vm421, %v417, inf
    %423 = vmin.xlane.f32.xlu0 %v422
    %v424 = vpop.xlane.xlu0 %423
    %v425 = vcvt.f32.s32 %v424
    %v426 = vcvt.f32.s32 %v420
    %v427 = vshll.u32 %v426, 16
    %v428 = vadd.s32 %v427, %v425
    %v429 = vand.u32 %v335, 65535
    %v430 = vshra.s32 %v335, 16
    %v431 = vcvt.s32.f32 %v429
    %v432 = vcvt.s32.f32 %v430
    %433 = vmin.xlane.f32.xlu0 %v432
    %v434 = vpop.xlane.xlu0 %433
    %vm435 = vcmp.eq.f32.partialorder %v432, %v434
    %v436 = vsel %vm435, %v431, inf
    %437 = vmin.xlane.f32.xlu0 %v436
    %v438 = vpop.xlane.xlu0 %437
    %v439 = vcvt.f32.s32 %v438
    %v440 = vcvt.f32.s32 %v434
    %v441 = vshll.u32 %v440, 16
    %v442 = vadd.s32 %v441, %v439
    %v443 = vand.u32 %v336, 65535
    %v444 = vshra.s32 %v336, 16
    %v445 = vcvt.s32.f32 %v443
    %v446 = vcvt.s32.f32 %v444
    %447 = vmin.xlane.f32.xlu0 %v446
    %v448 = vpop.xlane.xlu0 %447
    %vm449 = vcmp.eq.f32.partialorder %v446, %v448
    %v450 = vsel %vm449, %v445, inf
    %451 = vmin.xlane.f32.xlu0 %v450
    %v452 = vpop.xlane.xlu0 %451
    %v453 = vcvt.f32.s32 %v452
    %v454 = vcvt.f32.s32 %v448
    %v455 = vshll.u32 %v454, 16
    %v456 = vadd.s32 %v455, %v453
    %v457 = vand.u32 %v337, 65535
    %v458 = vshra.s32 %v337, 16
    %v459 = vcvt.s32.f32 %v457
    %v460 = vcvt.s32.f32 %v458
    %461 = vmin.xlane.f32.xlu0 %v460
    %v462 = vpop.xlane.xlu0 %461
    %vm463 = vcmp.eq.f32.partialorder %v460, %v462
    %v464 = vsel %vm463, %v459, inf
    %465 = vmin.xlane.f32.xlu0 %v464
    %v466 = vpop.xlane.xlu0 %465
    %v467 = vcvt.f32.s32 %v466
    %v468 = vcvt.f32.s32 %v462
    %v469 = vshll.u32 %v468, 16
    %v470 = vadd.s32 %v469, %v467
    %v471 = vand.u32 %v338, 65535
    %v472 = vshra.s32 %v338, 16
    %v473 = vcvt.s32.f32 %v471
    %v474 = vcvt.s32.f32 %v472
    %475 = vmin.xlane.f32.xlu0 %v474
    %v476 = vpop.xlane.xlu0 %475
    %vm477 = vcmp.eq.f32.partialorder %v474, %v476
    %v478 = vsel %vm477, %v473, inf
    %479 = vmin.xlane.f32.xlu0 %v478
    %v480 = vpop.xlane.xlu0 %479
    %v481 = vcvt.f32.s32 %v480
    %v482 = vcvt.f32.s32 %v476
    %v483 = vshll.u32 %v482, 16
    %v484 = vadd.s32 %v483, %v481
    %v485 = vand.u32 %v339, 65535
    %v486 = vshra.s32 %v339, 16
    %v487 = vcvt.s32.f32 %v485
    %v488 = vcvt.s32.f32 %v486
    %489 = vmin.xlane.f32.xlu0 %v488
    %v490 = vpop.xlane.xlu0 %489
    %vm491 = vcmp.eq.f32.partialorder %v488, %v490
    %v492 = vsel %vm491, %v487, inf
    %493 = vmin.xlane.f32.xlu0 %v492
    %v494 = vpop.xlane.xlu0 %493
    %v495 = vcvt.f32.s32 %v494
    %v496 = vcvt.f32.s32 %v490
    %v497 = vshll.u32 %v496, 16
    %v498 = vadd.s32 %v497, %v495
    %v499 = vand.u32 %v340, 65535
    %v500 = vshra.s32 %v340, 16
    %v501 = vcvt.s32.f32 %v499
    %v502 = vcvt.s32.f32 %v500
    %503 = vmin.xlane.f32.xlu0 %v502
    %v504 = vpop.xlane.xlu0 %503
    %vm505 = vcmp.eq.f32.partialorder %v502, %v504
    %v506 = vsel %vm505, %v501, inf
    %507 = vmin.xlane.f32.xlu0 %v506
    %v508 = vpop.xlane.xlu0 %507
    %v509 = vcvt.f32.s32 %v508
    %v510 = vcvt.f32.s32 %v504
    %v511 = vshll.u32 %v510, 16
    %v512 = vadd.s32 %v511, %v509
    %v513 = vand.u32 %v341, 65535
    %v514 = vshra.s32 %v341, 16
    %v515 = vcvt.s32.f32 %v513
    %v516 = vcvt.s32.f32 %v514
    %517 = vmin.xlane.f32.xlu0 %v516
    %v518 = vpop.xlane.xlu0 %517
    %vm519 = vcmp.eq.f32.partialorder %v516, %v518
    %v520 = vsel %vm519, %v515, inf
    %521 = vmin.xlane.f32.xlu0 %v520
    %v522 = vpop.xlane.xlu0 %521
    %v523 = vcvt.f32.s32 %v522
    %v524 = vcvt.f32.s32 %v518
    %v525 = vshll.u32 %v524, 16
    %v526 = vadd.s32 %v525, %v523
    %v527 = vand.u32 %v342, 65535
    %v528 = vshra.s32 %v342, 16
    %v529 = vcvt.s32.f32 %v527
    %v530 = vcvt.s32.f32 %v528
    %531 = vmin.xlane.f32.xlu0 %v530
    %v532 = vpop.xlane.xlu0 %531
    %vm533 = vcmp.eq.f32.partialorder %v530, %v532
    %v534 = vsel %vm533, %v529, inf
    %535 = vmin.xlane.f32.xlu0 %v534
    %v536 = vpop.xlane.xlu0 %535
    %v537 = vcvt.f32.s32 %v536
    %v538 = vcvt.f32.s32 %v532
    %v539 = vshll.u32 %v538, 16
    %v540 = vadd.s32 %v539, %v537
    %v541 = vand.u32 %v343, 65535
    %v542 = vshra.s32 %v343, 16
    %v543 = vcvt.s32.f32 %v541
    %v544 = vcvt.s32.f32 %v542
    %545 = vmin.xlane.f32.xlu0 %v544
    %v546 = vpop.xlane.xlu0 %545
    %vm547 = vcmp.eq.f32.partialorder %v544, %v546
    %v548 = vsel %vm547, %v543, inf
    %549 = vmin.xlane.f32.xlu0 %v548
    %v550 = vpop.xlane.xlu0 %549
    %v551 = vcvt.f32.s32 %v550
    %v552 = vcvt.f32.s32 %v546
    %v553 = vshll.u32 %v552, 16
    %v554 = vadd.s32 %v553, %v551
    %v555 = vand.u32 %v344, 65535
    %v556 = vshra.s32 %v344, 16
    %v557 = vcvt.s32.f32 %v555
    %v558 = vcvt.s32.f32 %v556
    %559 = vmin.xlane.f32.xlu0 %v558
    %v560 = vpop.xlane.xlu0 %559
    %vm561 = vcmp.eq.f32.partialorder %v558, %v560
    %v562 = vsel %vm561, %v557, inf
    %563 = vmin.xlane.f32.xlu0 %v562
    %v564 = vpop.xlane.xlu0 %563
    %v565 = vcvt.f32.s32 %v564
    %v566 = vcvt.f32.s32 %v560
    %v567 = vshll.u32 %v566, 16
    %v568 = vadd.s32 %v567, %v565
    %s569 = smul.u32 0, 128
    %v570 = vstv %s569
    %v571 = vadd.s32 %v358, %v570
    %v572 = vadd.s32 %v372, %v570
    %v573 = vadd.s32 %v386, %v570
    %v574 = vadd.s32 %v400, %v570
    %v575 = vadd.s32 %v414, %v570
    %v576 = vadd.s32 %v428, %v570
    %v577 = vadd.s32 %v442, %v570
    %v578 = vadd.s32 %v456, %v570
    %v579 = vadd.s32 %v470, %v570
    %v580 = vadd.s32 %v484, %v570
    %v581 = vadd.s32 %v498, %v570
    %v582 = vadd.s32 %v512, %v570
    %v583 = vadd.s32 %v526, %v570
    %v584 = vadd.s32 %v540, %v570
    %v585 = vadd.s32 %v554, %v570
    %v586 = vadd.s32 %v568, %v570
    %v587 = vld [vmem:[#allocation2] sm:$0xff]
    %v588 = vld [vmem:[#allocation2 + $0x8] sm:$0xff]
    %v589 = vld [vmem:[#allocation2 + $0x10] sm:$0xff]
    %v590 = vld [vmem:[#allocation2 + $0x18] sm:$0xff]
    %v591 = vld [vmem:[#allocation2 + $0x20] sm:$0xff]
    %v592 = vld [vmem:[#allocation2 + $0x28] sm:$0xff]
    %v593 = vld [vmem:[#allocation2 + $0x30] sm:$0xff]
    %v594 = vld [vmem:[#allocation2 + $0x38] sm:$0xff]
    %v595 = vld [vmem:[#allocation2 + $0x40] sm:$0xff]
    %v596 = vld [vmem:[#allocation2 + $0x48] sm:$0xff]
    %v597 = vld [vmem:[#allocation2 + $0x50] sm:$0xff]
    %v598 = vld [vmem:[#allocation2 + $0x58] sm:$0xff]
    %v599 = vld [vmem:[#allocation2 + $0x60] sm:$0xff]
    %v600 = vld [vmem:[#allocation2 + $0x68] sm:$0xff]
    %v601 = vld [vmem:[#allocation2 + $0x70] sm:$0xff]
    %v602 = vld [vmem:[#allocation2 + $0x78] sm:$0xff]
    %vm603 = vcmp.lt.f32.partialorder %v282, %v587
    %vm604 = vcmp.lt.f32.partialorder %v284, %v588
    %vm605 = vcmp.lt.f32.partialorder %v286, %v589
    %vm606 = vcmp.lt.f32.partialorder %v288, %v590
    %vm607 = vcmp.lt.f32.partialorder %v290, %v591
    %vm608 = vcmp.lt.f32.partialorder %v292, %v592
    %vm609 = vcmp.lt.f32.partialorder %v294, %v593
    %vm610 = vcmp.lt.f32.partialorder %v296, %v594
    %vm611 = vcmp.lt.f32.partialorder %v298, %v595
    %vm612 = vcmp.lt.f32.partialorder %v300, %v596
    %vm613 = vcmp.lt.f32.partialorder %v302, %v597
    %vm614 = vcmp.lt.f32.partialorder %v304, %v598
    %vm615 = vcmp.lt.f32.partialorder %v306, %v599
    %vm616 = vcmp.lt.f32.partialorder %v308, %v600
    %vm617 = vcmp.lt.f32.partialorder %v310, %v601
    %vm618 = vcmp.lt.f32.partialorder %v312, %v602
    %v619 = vld [vmem:[#allocation3] sm:$0xff]
    %v620 = vld [vmem:[#allocation3 + $0x8] sm:$0xff]
    %v621 = vld [vmem:[#allocation3 + $0x10] sm:$0xff]
    %v622 = vld [vmem:[#allocation3 + $0x18] sm:$0xff]
    %v623 = vld [vmem:[#allocation3 + $0x20] sm:$0xff]
    %v624 = vld [vmem:[#allocation3 + $0x28] sm:$0xff]
    %v625 = vld [vmem:[#allocation3 + $0x30] sm:$0xff]
    %v626 = vld [vmem:[#allocation3 + $0x38] sm:$0xff]
    %v627 = vld [vmem:[#allocation3 + $0x40] sm:$0xff]
    %v628 = vld [vmem:[#allocation3 + $0x48] sm:$0xff]
    %v629 = vld [vmem:[#allocation3 + $0x50] sm:$0xff]
    %v630 = vld [vmem:[#allocation3 + $0x58] sm:$0xff]
    %v631 = vld [vmem:[#allocation3 + $0x60] sm:$0xff]
    %v632 = vld [vmem:[#allocation3 + $0x68] sm:$0xff]
    %v633 = vld [vmem:[#allocation3 + $0x70] sm:$0xff]
    %v634 = vld [vmem:[#allocation3 + $0x78] sm:$0xff]
    %v635 = vsel %vm603, %v571, %v619
    %v636 = vsel %vm604, %v572, %v620
    %v637 = vsel %vm605, %v573, %v621
    %v638 = vsel %vm606, %v574, %v622
    %v639 = vsel %vm607, %v575, %v623
    %v640 = vsel %vm608, %v576, %v624
    %v641 = vsel %vm609, %v577, %v625
    %v642 = vsel %vm610, %v578, %v626
    %v643 = vsel %vm611, %v579, %v627
    %v644 = vsel %vm612, %v580, %v628
    %v645 = vsel %vm613, %v581, %v629
    %v646 = vsel %vm614, %v582, %v630
    %v647 = vsel %vm615, %v583, %v631
    %v648 = vsel %vm616, %v584, %v632
    %v649 = vsel %vm617, %v585, %v633
    %v650 = vsel %vm618, %v586, %v634
    %vm651 = vcmask 7168
    %652 = vst.msk [vmem:[#allocation3] sm:$0xff] %vm651, %v635
    %653 = vst.msk [vmem:[#allocation3 + $0x8] sm:$0xff] %vm651, %v636
    %654 = vst.msk [vmem:[#allocation3 + $0x10] sm:$0xff] %vm651, %v637
    %655 = vst.msk [vmem:[#allocation3 + $0x18] sm:$0xff] %vm651, %v638
    %656 = vst.msk [vmem:[#allocation3 + $0x20] sm:$0xff] %vm651, %v639
    %657 = vst.msk [vmem:[#allocation3 + $0x28] sm:$0xff] %vm651, %v640
    %658 = vst.msk [vmem:[#allocation3 + $0x30] sm:$0xff] %vm651, %v641
    %659 = vst.msk [vmem:[#allocation3 + $0x38] sm:$0xff] %vm651, %v642
    %660 = vst.msk [vmem:[#allocation3 + $0x40] sm:$0xff] %vm651, %v643
    %661 = vst.msk [vmem:[#allocation3 + $0x48] sm:$0xff] %vm651, %v644
    %662 = vst.msk [vmem:[#allocation3 + $0x50] sm:$0xff] %vm651, %v645
    %663 = vst.msk [vmem:[#allocation3 + $0x58] sm:$0xff] %vm651, %v646
    %664 = vst.msk [vmem:[#allocation3 + $0x60] sm:$0xff] %vm651, %v647
    %665 = vst.msk [vmem:[#allocation3 + $0x68] sm:$0xff] %vm651, %v648
    %666 = vst.msk [vmem:[#allocation3 + $0x70] sm:$0xff] %vm651, %v649
    %667 = vst.msk [vmem:[#allocation3 + $0x78] sm:$0xff] %vm651, %v650
    %v668 = vld [vmem:[#allocation2] sm:$0xff]
    %v669 = vld [vmem:[#allocation2 + $0x8] sm:$0xff]
    %v670 = vld [vmem:[#allocation2 + $0x10] sm:$0xff]
    %v671 = vld [vmem:[#allocation2 + $0x18] sm:$0xff]
    %v672 = vld [vmem:[#allocation2 + $0x20] sm:$0xff]
    %v673 = vld [vmem:[#allocation2 + $0x28] sm:$0xff]
    %v674 = vld [vmem:[#allocation2 + $0x30] sm:$0xff]
    %v675 = vld [vmem:[#allocation2 + $0x38] sm:$0xff]
    %v676 = vld [vmem:[#allocation2 + $0x40] sm:$0xff]
    %v677 = vld [vmem:[#allocation2 + $0x48] sm:$0xff]
    %v678 = vld [vmem:[#allocation2 + $0x50] sm:$0xff]
    %v679 = vld [vmem:[#allocation2 + $0x58] sm:$0xff]
    %v680 = vld [vmem:[#allocation2 + $0x60] sm:$0xff]
    %v681 = vld [vmem:[#allocation2 + $0x68] sm:$0xff]
    %v682 = vld [vmem:[#allocation2 + $0x70] sm:$0xff]
    %v683 = vld [vmem:[#allocation2 + $0x78] sm:$0xff]
    %v684 = vsel %vm603, %v282, %v668
    %v685 = vsel %vm604, %v284, %v669
    %v686 = vsel %vm605, %v286, %v670
    %v687 = vsel %vm606, %v288, %v671
    %v688 = vsel %vm607, %v290, %v672
    %v689 = vsel %vm608, %v292, %v673
    %v690 = vsel %vm609, %v294, %v674
    %v691 = vsel %vm610, %v296, %v675
    %v692 = vsel %vm611, %v298, %v676
    %v693 = vsel %vm612, %v300, %v677
    %v694 = vsel %vm613, %v302, %v678
    %v695 = vsel %vm614, %v304, %v679
    %v696 = vsel %vm615, %v306, %v680
    %v697 = vsel %vm616, %v308, %v681
    %v698 = vsel %vm617, %v310, %v682
    %v699 = vsel %vm618, %v312, %v683
    %700 = vst.msk [vmem:[#allocation2] sm:$0xff] %vm651, %v684
    %701 = vst.msk [vmem:[#allocation2 + $0x8] sm:$0xff] %vm651, %v685
    %702 = vst.msk [vmem:[#allocation2 + $0x10] sm:$0xff] %vm651, %v686
    %703 = vst.msk [vmem:[#allocation2 + $0x18] sm:$0xff] %vm651, %v687
    %704 = vst.msk [vmem:[#allocation2 + $0x20] sm:$0xff] %vm651, %v688
    %705 = vst.msk [vmem:[#allocation2 + $0x28] sm:$0xff] %vm651, %v689
    %706 = vst.msk [vmem:[#allocation2 + $0x30] sm:$0xff] %vm651, %v690
    %707 = vst.msk [vmem:[#allocation2 + $0x38] sm:$0xff] %vm651, %v691
    %708 = vst.msk [vmem:[#allocation2 + $0x40] sm:$0xff] %vm651, %v692
    %709 = vst.msk [vmem:[#allocation2 + $0x48] sm:$0xff] %vm651, %v693
    %710 = vst.msk [vmem:[#allocation2 + $0x50] sm:$0xff] %vm651, %v694
    %711 = vst.msk [vmem:[#allocation2 + $0x58] sm:$0xff] %vm651, %v695
    %712 = vst.msk [vmem:[#allocation2 + $0x60] sm:$0xff] %vm651, %v696
    %713 = vst.msk [vmem:[#allocation2 + $0x68] sm:$0xff] %vm651, %v697
    %714 = vst.msk [vmem:[#allocation2 + $0x70] sm:$0xff] %vm651, %v698
    %715 = vst.msk [vmem:[#allocation2 + $0x78] sm:$0xff] %vm651, %v699
    // Predicated region
    $region26: #{tpu_custom_call.1} parent=1 // pred_check
      %p716 = pneg %p42
    $region27: #{tpu_custom_call.1} parent=1 // pred_check_branch
      %718 = sbr.rel (%p716) target = $region29
    $region28: #{tpu_custom_call.1} parent=1 // pred_region
      %v719 = vld [vmem:[#allocation3] sm:$0xff]
      %v720 = vld [vmem:[#allocation3 + $0x8] sm:$0xff]
      %v721 = vld [vmem:[#allocation3 + $0x10] sm:$0xff]
      %v722 = vld [vmem:[#allocation3 + $0x18] sm:$0xff]
      %v723 = vld [vmem:[#allocation3 + $0x20] sm:$0xff]
      %v724 = vld [vmem:[#allocation3 + $0x28] sm:$0xff]
      %v725 = vld [vmem:[#allocation3 + $0x30] sm:$0xff]
      %v726 = vld [vmem:[#allocation3 + $0x38] sm:$0xff]
      %v727 = vld [vmem:[#allocation3 + $0x40] sm:$0xff]
      %v728 = vld [vmem:[#allocation3 + $0x48] sm:$0xff]
      %v729 = vld [vmem:[#allocation3 + $0x50] sm:$0xff]
      %v730 = vld [vmem:[#allocation3 + $0x58] sm:$0xff]
      %v731 = vld [vmem:[#allocation3 + $0x60] sm:$0xff]
      %v732 = vld [vmem:[#allocation3 + $0x68] sm:$0xff]
      %v733 = vld [vmem:[#allocation3 + $0x70] sm:$0xff]
      %v734 = vld [vmem:[#allocation3 + $0x78] sm:$0xff]
      %735 = vst.msk [vmem:[%s3] sm:$0xff] %vm651, %v719
      %736 = vst.msk [vmem:[%s3 + $0x8] sm:$0xff] %vm651, %v720
      %737 = vst.msk [vmem:[%s3 + $0x10] sm:$0xff] %vm651, %v721
      %738 = vst.msk [vmem:[%s3 + $0x18] sm:$0xff] %vm651, %v722
      %739 = vst.msk [vmem:[%s3 + $0x20] sm:$0xff] %vm651, %v723
      %740 = vst.msk [vmem:[%s3 + $0x28] sm:$0xff] %vm651, %v724
      %741 = vst.msk [vmem:[%s3 + $0x30] sm:$0xff] %vm651, %v725
      %742 = vst.msk [vmem:[%s3 + $0x38] sm:$0xff] %vm651, %v726
      %743 = vst.msk [vmem:[%s3 + $0x40] sm:$0xff] %vm651, %v727
      %744 = vst.msk [vmem:[%s3 + $0x48] sm:$0xff] %vm651, %v728
      %745 = vst.msk [vmem:[%s3 + $0x50] sm:$0xff] %vm651, %v729
      %746 = vst.msk [vmem:[%s3 + $0x58] sm:$0xff] %vm651, %v730
      %747 = vst.msk [vmem:[%s3 + $0x60] sm:$0xff] %vm651, %v731
      %748 = vst.msk [vmem:[%s3 + $0x68] sm:$0xff] %vm651, %v732
      %749 = vst.msk [vmem:[%s3 + $0x70] sm:$0xff] %vm651, %v733
      %750 = vst.msk [vmem:[%s3 + $0x78] sm:$0xff] %vm651, %v734
    $region29: #{tpu_custom_call.1} parent=1 // pred_fallthru
      _
    // Predicated region
    $region30: #{tpu_custom_call.1} parent=1 // pred_check
      _
    $region31: #{tpu_custom_call.1} parent=1 // pred_check_branch
      %752 = sbr.rel (0) target = $region33
    $region32: #{tpu_custom_call.1} parent=1 // pred_region
      _
    $region33: #{tpu_custom_call.1} parent=1 // pred_fallthru
      _
    // Predicated region
    $region34: #{tpu_custom_call.1} parent=1 // pred_check
      _
    $region35: #{tpu_custom_call.1} parent=1 // pred_check_branch
      %754 = sbr.rel (0) target = $region37
    $region36: #{tpu_custom_call.1} parent=1 // pred_region
      _
    $region37: #{tpu_custom_call.1} parent=1 // pred_fallthru
      _
    %755 = vsyncpa [#allocation5], 1
    %756 = vsyncpa [#allocation7], 1

</llo_original>
